<compile_context>
chip_gen: v5e
topology: v5e:2x2
jax: 0.10.0
libtpu: 0.0.40
codegen_flags: <defaults>
</compile_context>

<pallas_src>
import math

import jax
import jax.numpy as jnp
from jax.experimental import pallas as pl
from jax.experimental.pallas import tpu as pltpu

LANE = 128          # TPU lane width
SUBLANE = 8         # TPU sublane width
_MIB = 1024 * 1024


def _round_up(x, m):
    return ((x + m - 1) // m) * m


def _leaky_relu(x, negative_slope=0.2):
    return jnp.where(x > 0, x, negative_slope * x)


# --------------------------------------------------------------------------------------
# Kernel: 4 MXU matmuls (bf16 operands, f32 accumulation); bias add + LeakyReLU in f32 on
# the VPU; the last layer is split into freq / phase halves so both outputs are written as
# lane-dense tiles directly from the kernel (no post-kernel slicing of a padded buffer).
# --------------------------------------------------------------------------------------
def mapping_kernel(z_ref,
                   w1_ref, b1_ref,
                   w2_ref, b2_ref,
                   w3_ref, b3_ref,
                   wf_ref, bf_ref,
                   wp_ref, bp_ref,
                   freq_ref, phase_ref):
    h = jnp.dot(z_ref[...], w1_ref[...], preferred_element_type=jnp.float32) + b1_ref[...]
    h = _leaky_relu(h).astype(w2_ref.dtype)
    h = jnp.dot(h, w2_ref[...], preferred_element_type=jnp.float32) + b2_ref[...]
    h = _leaky_relu(h).astype(w3_ref.dtype)
    h = jnp.dot(h, w3_ref[...], preferred_element_type=jnp.float32) + b3_ref[...]
    h = _leaky_relu(h).astype(wf_ref.dtype)
    f = jnp.dot(h, wf_ref[...], preferred_element_type=jnp.float32) + bf_ref[...]
    p = jnp.dot(h, wp_ref[...], preferred_element_type=jnp.float32) + bp_ref[...]
    freq_ref[...] = f.astype(freq_ref.dtype)
    phase_ref[...] = p.astype(phase_ref.dtype)


# --------------------------------------------------------------------------------------
# One-time parameter preparation (hoisted out of the per-call path): pad feature dims to
# 128-lane multiples, cast weights to the compute dtype, split the last layer into the
# frequency / phase halves. Zero K-padding is exact for the f32 accumulation.
# --------------------------------------------------------------------------------------
def _prepare_params(params, compute_dtype):
    if len(params) != 4:
        raise ValueError("CustomMappingNetwork expects exactly 4 linear layers")
    out_dim = params[-1][0].shape[1]
    if out_dim % 2 != 0:
        raise ValueError("map_output_dim must be even (freq/phase split)")
    half = out_dim // 2
    half_pad = _round_up(half, LANE)

    flat = []
    for i, (W, b) in enumerate(params):
        W = jnp.asarray(W)
        b = jnp.asarray(b).reshape(1, -1)
        fin, fout = W.shape
        pi = _round_up(fin, LANE)
        if i < 3:
            po = _round_up(fout, LANE)
            Wp = (jnp.zeros((pi, po), compute_dtype)
                  .at[:fin, :fout].set(W.astype(compute_dtype)))
            bp = (jnp.zeros((1, po), jnp.float32)
                  .at[:, :fout].set(b.astype(jnp.float32)))
            flat += [Wp, bp]
        else:
            # Last layer: split columns into (frequencies | phase_shifts) halves.
            for lo, hi in ((0, half), (half, out_dim)):
                Wh = W[:, lo:hi]
                bh = b[:, lo:hi]
                Whp = (jnp.zeros((pi, half_pad), compute_dtype)
                       .at[:fin, :half].set(Wh.astype(compute_dtype)))
                bhp = (jnp.zeros((1, half_pad), jnp.float32)
                       .at[:, :half].set(bh.astype(jnp.float32)))
                flat += [Whp, bhp]

    meta = dict(
        z_dim=params[0][0].shape[0],
        in_pad=_round_up(params[0][0].shape[0], LANE),
        hidden_pad=_round_up(params[0][0].shape[1], LANE),
        half=half,
        half_pad=half_pad,
    )
    return flat, meta


def _vmem_capacity_bytes():
    """Physical VMEM per TensorCore; conservative (v7x-sized) fallback if unavailable."""
    try:
        info = pltpu.get_tpu_info()
        for name in ("vmem_capacity_bytes", "vmem_bytes", "vmem_size_bytes"):
            v = getattr(info, name, None)
            if v:
                return int(v)
    except Exception:
        pass
    return 64 * _MIB


def _choose_tiling(B, meta, flat_params, vmem_cap, compute_dtype, out_dtype):
    """Pick (b_tile, b_pad, vmem_limit) per TPU generation under a VMEM budget."""
    if vmem_cap <= 64 * _MIB:        # v7x: 64 MiB VMEM per TensorCore, 2 TCs/chip
        max_tile, vmem_limit, two_cores = 1024, 48 * _MIB, True
    else:                             # v5e / v6e: 128 MiB VMEM
        max_tile, vmem_limit, two_cores = 2048, 96 * _MIB, False

    csize = jnp.dtype(compute_dtype).itemsize
    osize = jnp.dtype(out_dtype).itemsize
    # Resident weights/biases (constant index maps); assume double-buffered allocation.
    weight_bytes = 2 * sum(a.size * a.dtype.itemsize for a in flat_params)
    # Streaming bytes per batch row: z tile (x2 buffers), two output tiles (x2 buffers),
    # plus f32 intermediate headroom.
    per_row = (meta["in_pad"] * csize * 2
               + 2 * meta["half_pad"] * osize * 2
               + meta["hidden_pad"] * 4 * 4)
    budget = int(0.7 * vmem_limit) - weight_bytes
    fit = max(SUBLANE, (budget // max(per_row, 1)) // SUBLANE * SUBLANE)
    b_tile = min(max_tile, fit, _round_up(B, SUBLANE))
    # v7x: guarantee >=2 grid steps so dimension_semantics=("parallel",) shards the batch
    # across both TensorCores (with grid=(1,) one TC would idle).
    if two_cores and B >= 2 * SUBLANE and _round_up(B, b_tile) // b_tile < 2:
        b_tile = _round_up((B + 1) // 2, SUBLANE)
    b_pad = _round_up(B, b_tile)
    return b_tile, b_pad, vmem_limit


# --------------------------------------------------------------------------------------
# Public API: build a jitted forward with weights pre-padded/cast once.
# --------------------------------------------------------------------------------------
def make_mapping_fn(params, *, compute_dtype=jnp.bfloat16, out_dtype=jnp.float32):
    """params: list of 4 (W, b); W (in, out) f32, b (1, out) or (out,) f32.
    Returns forward(z) -> (frequencies, phase_shifts), each (B, out_dim // 2) in out_dtype."""
    flat, meta = _prepare_params(params, compute_dtype)
    vmem_cap = _vmem_capacity_bytes()

    @jax.jit
    def _fwd(z, *flat_params):
        B, z_dim = z.shape
        assert z_dim == meta["z_dim"], "z feature dim does not match the mapping network"
        b_tile, b_pad, vmem_limit = _choose_tiling(
            B, meta, flat_params, vmem_cap, compute_dtype, out_dtype)
        in_pad, half_pad, half = meta["in_pad"], meta["half_pad"], meta["half"]

        # Pad/cast z under the same jit as the kernel launch (fuses; no extra HBM pass).
        z_p = (jnp.zeros((b_pad, in_pad), compute_dtype)
               .at[:B, :z_dim].set(z.astype(compute_dtype)))

        in_specs = [pl.BlockSpec((b_tile, in_pad), lambda i: (i, 0))]
        # Constant index maps: weights & biases DMA'd once, resident across all grid steps.
        in_specs += [pl.BlockSpec(a.shape, lambda i: (0, 0)) for a in flat_params]
        out_specs = (pl.BlockSpec((b_tile, half_pad), lambda i: (i, 0)),
                     pl.BlockSpec((b_tile, half_pad), lambda i: (i, 0)))
        out_shape = (jax.ShapeDtypeStruct((b_pad, half_pad), out_dtype),
                     jax.ShapeDtypeStruct((b_pad, half_pad), out_dtype))

        freq_p, phase_p = pl.pallas_call(
            mapping_kernel,
            out_shape=out_shape,
            grid=(b_pad // b_tile,),
            in_specs=in_specs,
            out_specs=out_specs,
            compiler_params=pltpu.CompilerParams(
                dimension_semantics=("parallel",),   # megacore / 2-TC batch sharding
                vmem_limit_bytes=vmem_limit,
            ),
        )(z_p, *flat_params)

        # Drop batch/lane padding only; freq/phase already separated by the kernel.
        return freq_p[:B, :half], phase_p[:B, :half]

    def forward(z):
        return _fwd(z, *flat)

    return forward


def custom_mapping_network(z, params, *, compute_dtype=jnp.bfloat16, out_dtype=jnp.float32):
    """One-shot convenience wrapper (prefer make_mapping_fn to hoist weight prep)."""
    return make_mapping_fn(params, compute_dtype=compute_dtype, out_dtype=out_dtype)(z)


# --------------------------------------------------------------------------------------
# Init + pure-JAX reference (same dtype path) for correctness checking.
# --------------------------------------------------------------------------------------
def init_params(key, z_dim, map_hidden_dim, map_output_dim):
    """Mirrors the PyTorch module init:
       - kaiming_normal_(a=0.2, mode='fan_in', nonlinearity='leaky_relu') for weights
       - default nn.Linear bias init: U(-1/sqrt(fan_in), 1/sqrt(fan_in))
       - last layer weight scaled by 0.25
    """
    dims = [(z_dim, map_hidden_dim),
            (map_hidden_dim, map_hidden_dim),
            (map_hidden_dim, map_hidden_dim),
            (map_hidden_dim, map_output_dim)]
    a = 0.2
    gain = math.sqrt(2.0 / (1.0 + a * a))
    params = []
    for i, (fan_in, fan_out) in enumerate(dims):
        key, kw, kb = jax.random.split(key, 3)
        std = gain / math.sqrt(fan_in)
        W = jax.random.normal(kw, (fan_in, fan_out), dtype=jnp.float32) * std  # stored (in, out)
        if i == len(dims) - 1:
            W = W * 0.25
        bound = 1.0 / math.sqrt(fan_in)
        b = jax.random.uniform(kb, (1, fan_out), dtype=jnp.float32,
                               minval=-bound, maxval=bound)
        params.append((W, b))
    return params


def reference_forward(z, params, compute_dtype=jnp.bfloat16):
    """Pure-JAX reference with the same bf16-operand / f32-accumulate dtype path."""
    h = z.astype(compute_dtype)
    for i, (W, b) in enumerate(params):
        h = jnp.dot(h, W.astype(compute_dtype),
                    preferred_element_type=jnp.float32) + b.astype(jnp.float32)
        if i < len(params) - 1:
            h = _leaky_relu(h).astype(compute_dtype)
    half = h.shape[-1] // 2
    return h[..., :half], h[..., half:]


if __name__ == "__main__":
    # Small shapes consistent with the module's forward: z (B, z_dim).
    B, z_dim, hidden, out_dim = 8, 32, 64, 64

    key = jax.random.PRNGKey(0)
    key, kz = jax.random.split(key)
    z = jax.random.normal(kz, (B, z_dim), dtype=jnp.float32)

    params = init_params(key, z_dim, hidden, out_dim)

    forward = make_mapping_fn(params)          # weight pad/cast hoisted here, done once
    freqs, phases = forward(z)
    jax.block_until_ready((freqs, phases))

    # Cross-check against a pure-JAX reference using the same bf16/f32 dtype path.
    ref_f, ref_p = reference_forward(z, params)
    assert freqs.shape == (B, out_dim // 2)
    assert phases.shape == (B, out_dim // 2)
    assert jnp.allclose(freqs, ref_f, atol=2e-3, rtol=2e-3)
    assert jnp.allclose(phases, ref_p, atol=2e-3, rtol=2e-3)

    print("KERNEL_OK")
</pallas_src>

<mosaic_0001>
module attributes {stable_mosaic.version = 11 : i64} {
  func.func @mapping_kernel(%arg0: i32, %arg1: memref<8x128xbf16, #tpu.memory_space<vmem>>, %arg2: memref<128x128xbf16, #tpu.memory_space<vmem>>, %arg3: memref<1x128xf32, #tpu.memory_space<vmem>>, %arg4: memref<128x128xbf16, #tpu.memory_space<vmem>>, %arg5: memref<1x128xf32, #tpu.memory_space<vmem>>, %arg6: memref<128x128xbf16, #tpu.memory_space<vmem>>, %arg7: memref<1x128xf32, #tpu.memory_space<vmem>>, %arg8: memref<128x128xbf16, #tpu.memory_space<vmem>>, %arg9: memref<1x128xf32, #tpu.memory_space<vmem>>, %arg10: memref<128x128xbf16, #tpu.memory_space<vmem>>, %arg11: memref<1x128xf32, #tpu.memory_space<vmem>>, %arg12: memref<8x128xf32, #tpu.memory_space<vmem>>, %arg13: memref<8x128xf32, #tpu.memory_space<vmem>>) attributes {dimension_semantics = [#tpu.dimension_semantics<parallel>], iteration_bounds = array<i64: 1>, scalar_prefetch = 0 : i64, scratch_operands = 0 : i64, tpu.core_type = #tpu.core_type<tc>, window_params = [{transform_indices = @transform_0, window_bounds = array<i64: 8, 128>}, {pipeline_mode = #tpu.pipeline_mode<synchronous>, transform_indices = @transform_1, window_bounds = array<i64: 128, 128>}, {pipeline_mode = #tpu.pipeline_mode<synchronous>, transform_indices = @transform_2, window_bounds = array<i64: 1, 128>}, {pipeline_mode = #tpu.pipeline_mode<synchronous>, transform_indices = @transform_3, window_bounds = array<i64: 128, 128>}, {pipeline_mode = #tpu.pipeline_mode<synchronous>, transform_indices = @transform_4, window_bounds = array<i64: 1, 128>}, {pipeline_mode = #tpu.pipeline_mode<synchronous>, transform_indices = @transform_5, window_bounds = array<i64: 128, 128>}, {pipeline_mode = #tpu.pipeline_mode<synchronous>, transform_indices = @transform_6, window_bounds = array<i64: 1, 128>}, {pipeline_mode = #tpu.pipeline_mode<synchronous>, transform_indices = @transform_7, window_bounds = array<i64: 128, 128>}, {pipeline_mode = #tpu.pipeline_mode<synchronous>, transform_indices = @transform_8, window_bounds = array<i64: 1, 128>}, {pipeline_mode = #tpu.pipeline_mode<synchronous>, transform_indices = @transform_9, window_bounds = array<i64: 128, 128>}, {pipeline_mode = #tpu.pipeline_mode<synchronous>, transform_indices = @transform_10, window_bounds = array<i64: 1, 128>}, {transform_indices = @transform_11, window_bounds = array<i64: 8, 128>}, {transform_indices = @transform_12, window_bounds = array<i64: 8, 128>}]} {
    %c0 = arith.constant 0 : index
    %c0_0 = arith.constant 0 : index
    %0 = vector.load %arg1[%c0, %c0_0] : memref<8x128xbf16, #tpu.memory_space<vmem>>, vector<8x128xbf16>
    %c0_1 = arith.constant 0 : index
    %c0_2 = arith.constant 0 : index
    %1 = vector.load %arg2[%c0_1, %c0_2] : memref<128x128xbf16, #tpu.memory_space<vmem>>, vector<128x128xbf16>
    %cst = arith.constant dense<0.000000e+00> : vector<8x128xf32>
    %2 = tpu.matmul %0, %1, %cst {dimension_numbers = #tpu.dot_dimension_numbers<[1], [0], [0], [1], [0, 0, 1, 1], [], []>} : vector<8x128xbf16>, vector<128x128xbf16>, vector<8x128xf32> -> vector<8x128xf32>
    %c0_3 = arith.constant 0 : index
    %c0_4 = arith.constant 0 : index
    %3 = vector.load %arg3[%c0_3, %c0_4] : memref<1x128xf32, #tpu.memory_space<vmem>>, vector<1x128xf32>
    %4 = vector.broadcast %3 : vector<1x128xf32> to vector<8x128xf32>
    %5 = arith.addf %2, %4 : vector<8x128xf32>
    %cst_5 = arith.constant 0.000000e+00 : f32
    %6 = vector.broadcast %cst_5 : f32 to vector<8x128xf32>
    %7 = arith.cmpf ogt, %5, %6 : vector<8x128xf32>
    %cst_6 = arith.constant 2.000000e-01 : f32
    %8 = vector.broadcast %cst_6 : f32 to vector<8x128xf32>
    %9 = arith.mulf %8, %5 : vector<8x128xf32>
    %10 = arith.select %7, %5, %9 : vector<8x128xi1>, vector<8x128xf32>
    %11 = arith.truncf %10 : vector<8x128xf32> to vector<8x128xbf16>
    %c0_7 = arith.constant 0 : index
    %c0_8 = arith.constant 0 : index
    %12 = vector.load %arg4[%c0_7, %c0_8] : memref<128x128xbf16, #tpu.memory_space<vmem>>, vector<128x128xbf16>
    %cst_9 = arith.constant dense<0.000000e+00> : vector<8x128xf32>
    %13 = tpu.matmul %11, %12, %cst_9 {dimension_numbers = #tpu.dot_dimension_numbers<[1], [0], [0], [1], [0, 0, 1, 1], [], []>} : vector<8x128xbf16>, vector<128x128xbf16>, vector<8x128xf32> -> vector<8x128xf32>
    %c0_10 = arith.constant 0 : index
    %c0_11 = arith.constant 0 : index
    %14 = vector.load %arg5[%c0_10, %c0_11] : memref<1x128xf32, #tpu.memory_space<vmem>>, vector<1x128xf32>
    %15 = vector.broadcast %14 : vector<1x128xf32> to vector<8x128xf32>
    %16 = arith.addf %13, %15 : vector<8x128xf32>
    %cst_12 = arith.constant 0.000000e+00 : f32
    %17 = vector.broadcast %cst_12 : f32 to vector<8x128xf32>
    %18 = arith.cmpf ogt, %16, %17 : vector<8x128xf32>
    %cst_13 = arith.constant 2.000000e-01 : f32
    %19 = vector.broadcast %cst_13 : f32 to vector<8x128xf32>
    %20 = arith.mulf %19, %16 : vector<8x128xf32>
    %21 = arith.select %18, %16, %20 : vector<8x128xi1>, vector<8x128xf32>
    %22 = arith.truncf %21 : vector<8x128xf32> to vector<8x128xbf16>
    %c0_14 = arith.constant 0 : index
    %c0_15 = arith.constant 0 : index
    %23 = vector.load %arg6[%c0_14, %c0_15] : memref<128x128xbf16, #tpu.memory_space<vmem>>, vector<128x128xbf16>
    %cst_16 = arith.constant dense<0.000000e+00> : vector<8x128xf32>
    %24 = tpu.matmul %22, %23, %cst_16 {dimension_numbers = #tpu.dot_dimension_numbers<[1], [0], [0], [1], [0, 0, 1, 1], [], []>} : vector<8x128xbf16>, vector<128x128xbf16>, vector<8x128xf32> -> vector<8x128xf32>
    %c0_17 = arith.constant 0 : index
    %c0_18 = arith.constant 0 : index
    %25 = vector.load %arg7[%c0_17, %c0_18] : memref<1x128xf32, #tpu.memory_space<vmem>>, vector<1x128xf32>
    %26 = vector.broadcast %25 : vector<1x128xf32> to vector<8x128xf32>
    %27 = arith.addf %24, %26 : vector<8x128xf32>
    %cst_19 = arith.constant 0.000000e+00 : f32
    %28 = vector.broadcast %cst_19 : f32 to vector<8x128xf32>
    %29 = arith.cmpf ogt, %27, %28 : vector<8x128xf32>
    %cst_20 = arith.constant 2.000000e-01 : f32
    %30 = vector.broadcast %cst_20 : f32 to vector<8x128xf32>
    %31 = arith.mulf %30, %27 : vector<8x128xf32>
    %32 = arith.select %29, %27, %31 : vector<8x128xi1>, vector<8x128xf32>
    %33 = arith.truncf %32 : vector<8x128xf32> to vector<8x128xbf16>
    %c0_21 = arith.constant 0 : index
    %c0_22 = arith.constant 0 : index
    %34 = vector.load %arg8[%c0_21, %c0_22] : memref<128x128xbf16, #tpu.memory_space<vmem>>, vector<128x128xbf16>
    %cst_23 = arith.constant dense<0.000000e+00> : vector<8x128xf32>
    %35 = tpu.matmul %33, %34, %cst_23 {dimension_numbers = #tpu.dot_dimension_numbers<[1], [0], [0], [1], [0, 0, 1, 1], [], []>} : vector<8x128xbf16>, vector<128x128xbf16>, vector<8x128xf32> -> vector<8x128xf32>
    %c0_24 = arith.constant 0 : index
    %c0_25 = arith.constant 0 : index
    %36 = vector.load %arg9[%c0_24, %c0_25] : memref<1x128xf32, #tpu.memory_space<vmem>>, vector<1x128xf32>
    %37 = vector.broadcast %36 : vector<1x128xf32> to vector<8x128xf32>
    %38 = arith.addf %35, %37 : vector<8x128xf32>
    %c0_26 = arith.constant 0 : index
    %c0_27 = arith.constant 0 : index
    %39 = vector.load %arg10[%c0_26, %c0_27] : memref<128x128xbf16, #tpu.memory_space<vmem>>, vector<128x128xbf16>
    %cst_28 = arith.constant dense<0.000000e+00> : vector<8x128xf32>
    %40 = tpu.matmul %33, %39, %cst_28 {dimension_numbers = #tpu.dot_dimension_numbers<[1], [0], [0], [1], [0, 0, 1, 1], [], []>} : vector<8x128xbf16>, vector<128x128xbf16>, vector<8x128xf32> -> vector<8x128xf32>
    %c0_29 = arith.constant 0 : index
    %c0_30 = arith.constant 0 : index
    %41 = vector.load %arg11[%c0_29, %c0_30] : memref<1x128xf32, #tpu.memory_space<vmem>>, vector<1x128xf32>
    %42 = vector.broadcast %41 : vector<1x128xf32> to vector<8x128xf32>
    %43 = arith.addf %40, %42 : vector<8x128xf32>
    %c0_31 = arith.constant 0 : index
    %c0_32 = arith.constant 0 : index
    %44 = vector.load %arg12[%c0_31, %c0_32] : memref<8x128xf32, #tpu.memory_space<vmem>>, vector<8x128xf32>
    tpu.vector_store %arg12[%c0_31, %c0_32], %38 {strides = array<i32>} : memref<8x128xf32, #tpu.memory_space<vmem>>, vector<8x128xf32>,
    %c0_33 = arith.constant 0 : index
    %c0_34 = arith.constant 0 : index
    %45 = vector.load %arg13[%c0_33, %c0_34] : memref<8x128xf32, #tpu.memory_space<vmem>>, vector<8x128xf32>
    tpu.vector_store %arg13[%c0_33, %c0_34], %43 {strides = array<i32>} : memref<8x128xf32, #tpu.memory_space<vmem>>, vector<8x128xf32>,
    return
  }
  func.func @transform_0(%arg0: i32) -> (i32, i32) {
    %c0_i32 = arith.constant 0 : i32
    %c0_i32_0 = arith.constant 0 : i32
    return %arg0, %c0_i32 : i32, i32
  }
  func.func @transform_1(%arg0: i32) -> (i32, i32) {
    %c0_i32 = arith.constant 0 : i32
    %c0_i32_0 = arith.constant 0 : i32
    %c0_i32_1 = arith.constant 0 : i32
    return %c0_i32, %c0_i32_0 : i32, i32
  }
  func.func @transform_2(%arg0: i32) -> (i32, i32) {
    %c0_i32 = arith.constant 0 : i32
    %c0_i32_0 = arith.constant 0 : i32
    %c0_i32_1 = arith.constant 0 : i32
    return %c0_i32, %c0_i32_0 : i32, i32
  }
  func.func @transform_3(%arg0: i32) -> (i32, i32) {
    %c0_i32 = arith.constant 0 : i32
    %c0_i32_0 = arith.constant 0 : i32
    %c0_i32_1 = arith.constant 0 : i32
    return %c0_i32, %c0_i32_0 : i32, i32
  }
  func.func @transform_4(%arg0: i32) -> (i32, i32) {
    %c0_i32 = arith.constant 0 : i32
    %c0_i32_0 = arith.constant 0 : i32
    %c0_i32_1 = arith.constant 0 : i32
    return %c0_i32, %c0_i32_0 : i32, i32
  }
  func.func @transform_5(%arg0: i32) -> (i32, i32) {
    %c0_i32 = arith.constant 0 : i32
    %c0_i32_0 = arith.constant 0 : i32
    %c0_i32_1 = arith.constant 0 : i32
    return %c0_i32, %c0_i32_0 : i32, i32
  }
  func.func @transform_6(%arg0: i32) -> (i32, i32) {
    %c0_i32 = arith.constant 0 : i32
    %c0_i32_0 = arith.constant 0 : i32
    %c0_i32_1 = arith.constant 0 : i32
    return %c0_i32, %c0_i32_0 : i32, i32
  }
  func.func @transform_7(%arg0: i32) -> (i32, i32) {
    %c0_i32 = arith.constant 0 : i32
    %c0_i32_0 = arith.constant 0 : i32
    %c0_i32_1 = arith.constant 0 : i32
    return %c0_i32, %c0_i32_0 : i32, i32
  }
  func.func @transform_8(%arg0: i32) -> (i32, i32) {
    %c0_i32 = arith.constant 0 : i32
    %c0_i32_0 = arith.constant 0 : i32
    %c0_i32_1 = arith.constant 0 : i32
    return %c0_i32, %c0_i32_0 : i32, i32
  }
  func.func @transform_9(%arg0: i32) -> (i32, i32) {
    %c0_i32 = arith.constant 0 : i32
    %c0_i32_0 = arith.constant 0 : i32
    %c0_i32_1 = arith.constant 0 : i32
    return %c0_i32, %c0_i32_0 : i32, i32
  }
  func.func @transform_10(%arg0: i32) -> (i32, i32) {
    %c0_i32 = arith.constant 0 : i32
    %c0_i32_0 = arith.constant 0 : i32
    %c0_i32_1 = arith.constant 0 : i32
    return %c0_i32, %c0_i32_0 : i32, i32
  }
  func.func @transform_11(%arg0: i32) -> (i32, i32) {
    %c0_i32 = arith.constant 0 : i32
    %c0_i32_0 = arith.constant 0 : i32
    return %arg0, %c0_i32 : i32, i32
  }
  func.func @transform_12(%arg0: i32) -> (i32, i32) {
    %c0_i32 = arith.constant 0 : i32
    %c0_i32_0 = arith.constant 0 : i32
    return %arg0, %c0_i32 : i32, i32
  }
}

</mosaic_0001>

<llo_original>
// kernel: _fwd.1
$region0: #{_fwd.1}
  #allocation0 [shape = 'u32[]', space=smem, size = 0x4, offset = 0x4, fixed_abs, tag = 'smem constant byte address 0x4 - core index']
  #allocation1 [shape = 'u32[72,128]{1,0:T(1,128)}', space=vmem, size = 0x9000, scoped, tag = 'internal scratch']
  %s0 = inlined_call_operand.vmem [shape: bf16[8,128], index: 0, kind: input, shape index: {}]
  %s1 = inlined_call_operand.hbm [shape: bf16[128,128], index: 1, kind: input, shape index: {}]
  %s2 = inlined_call_operand.vmem [shape: f32[1,128], index: 2, kind: input, shape index: {}]
  %s3 = inlined_call_operand.hbm [shape: bf16[128,128], index: 3, kind: input, shape index: {}]
  %s4 = inlined_call_operand.vmem [shape: f32[1,128], index: 4, kind: input, shape index: {}]
  %s5 = inlined_call_operand.hbm [shape: bf16[128,128], index: 5, kind: input, shape index: {}]
  %s6 = inlined_call_operand.vmem [shape: f32[1,128], index: 6, kind: input, shape index: {}]
  %s7 = inlined_call_operand.hbm [shape: bf16[128,128], index: 7, kind: input, shape index: {}]
  %s8 = inlined_call_operand.vmem [shape: f32[1,128], index: 8, kind: input, shape index: {}]
  %s9 = inlined_call_operand.hbm [shape: bf16[128,128], index: 9, kind: input, shape index: {}]
  %s10 = inlined_call_operand.vmem [shape: f32[1,128], index: 10, kind: input, shape index: {}]
  %s11 = inlined_call_operand.hbm [shape: f32[8,128], index: 11, kind: output, shape index: {0}]
  %s12 = inlined_call_operand.hbm [shape: f32[8,128], index: 12, kind: output, shape index: {1}]
  %13 = xla_tuple %s11, %s12
  %s14 = sld [smem:[#allocation0]]
  $region82: #{_fwd.1} parent=0
    _
  %s16 = ssub.s32 1, %s14
  %s17 = scalar_select 0, %s16, %s14
  $region1: #{_fwd.1} parent=0
    #allocation2 [shape = 'u8[32768]{0}', space=vmem, size = 0x8000, scoped, tag = 'input window, operand 1, single buffered']
    #allocation3 [shape = 's32[1]{0}', space=sflag, size = 0x4, scoped, tag = 'scoped memory for _fwd.1']
    #allocation4 [shape = 's32[1]{0}', space=sflag, size = 0x4, scoped, tag = 'scoped memory for _fwd.1']
    #allocation5 [shape = 'u8[32768]{0}', space=vmem, size = 0x8000, scoped, tag = 'input window, operand 3, single buffered']
    #allocation6 [shape = 's32[1]{0}', space=sflag, size = 0x4, scoped, tag = 'scoped memory for _fwd.1']
    #allocation7 [shape = 'u8[32768]{0}', space=vmem, size = 0x8000, scoped, tag = 'input window, operand 5, single buffered']
    #allocation8 [shape = 'u8[32768]{0}', space=vmem, size = 0x8000, scoped, tag = 'input window, operand 7, single buffered']
    #allocation9 [shape = 's32[1]{0}', space=sflag, size = 0x4, scoped, tag = 'scoped memory for _fwd.1']
    #allocation10 [shape = 'u8[32768]{0}', space=vmem, size = 0x8000, scoped, tag = 'input window, operand 9, single buffered']
    #allocation11 [shape = 'u8[4096]{0}', space=vmem, size = 0x1000, scoped, tag = 'output window, operand 0, single buffered']
    #allocation12 [shape = 'u8[4096]{0}', space=vmem, size = 0x1000, scoped, tag = 'output window, operand 1, single buffered']
    #allocation13 [shape = 's32[1]{0}', space=sflag, size = 0x4, scoped, tag = 'scoped memory for _fwd.1']
    %18 = vsyncpa [#allocation3], 0
    %19 = vsyncpa [#allocation6], 0
    %20 = vsyncpa [#allocation9], 0
    %21 = vsyncpa [#allocation4], 0
    %22 = vsyncpa [#allocation13], 0
    // Predicated region
    $region2: #{_fwd.1} parent=1 // pred_check
      _
    $region3: #{_fwd.1} parent=1 // pred_check_branch
      %24 = sbr.rel (0) target = $region5
    $region4: #{_fwd.1} parent=1 // pred_region
      _
    $region5: #{_fwd.1} parent=1 // pred_fallthru
      _
    // Predicated region
    $region6: #{_fwd.1} parent=1 // pred_check
      _
    $region7: #{_fwd.1} parent=1 // pred_check_branch
      %26 = sbr.rel (0) target = $region9
    $region8: #{_fwd.1} parent=1 // pred_region
      %28 = vsyncadd [#allocation3], 0
      %s29 = sshll.u32 %s1, 4
      %s30 = int_to_ptr.hbm [resolvable:$true] %s29
      %s31 = sshll.u32 [#allocation2], 4
      %s32 = int_to_ptr.vmem [resolvable:$true] %s31
      %37 = dma.hbm_to_vmem [thread:$0]  %s30, 1024, %s32, [#allocation3], 64, 64, 4
    $region9: #{_fwd.1} parent=1 // pred_fallthru
      _
    // Predicated region
    $region10: #{_fwd.1} parent=1 // pred_check
      _
    $region11: #{_fwd.1} parent=1 // pred_check_branch
      %39 = sbr.rel (0) target = $region13
    $region12: #{_fwd.1} parent=1 // pred_region
      _
    $region13: #{_fwd.1} parent=1 // pred_fallthru
      _
    // Predicated region
    $region14: #{_fwd.1} parent=1 // pred_check
      _
    $region15: #{_fwd.1} parent=1 // pred_check_branch
      %41 = sbr.rel (0) target = $region17
    $region16: #{_fwd.1} parent=1 // pred_region
      %43 = vsyncadd [#allocation6], 0
      %s44 = sshll.u32 %s3, 4
      %s45 = int_to_ptr.hbm [resolvable:$true] %s44
      %s46 = sshll.u32 [#allocation5], 4
      %s47 = int_to_ptr.vmem [resolvable:$true] %s46
      %52 = dma.hbm_to_vmem [thread:$0]  %s45, 1024, %s47, [#allocation6], 64, 64, 4
    $region17: #{_fwd.1} parent=1 // pred_fallthru
      _
    // Predicated region
    $region18: #{_fwd.1} parent=1 // pred_check
      _
    $region19: #{_fwd.1} parent=1 // pred_check_branch
      %54 = sbr.rel (0) target = $region21
    $region20: #{_fwd.1} parent=1 // pred_region
      _
    $region21: #{_fwd.1} parent=1 // pred_fallthru
      _
    // Predicated region
    $region22: #{_fwd.1} parent=1 // pred_check
      _
    $region23: #{_fwd.1} parent=1 // pred_check_branch
      %56 = sbr.rel (0) target = $region25
    $region24: #{_fwd.1} parent=1 // pred_region
      %58 = vsyncadd [#allocation6], 0
      %s59 = sshll.u32 %s5, 4
      %s60 = int_to_ptr.hbm [resolvable:$true] %s59
      %s61 = sshll.u32 [#allocation7], 4
      %s62 = int_to_ptr.vmem [resolvable:$true] %s61
      %67 = dma.hbm_to_vmem [thread:$0]  %s60, 1024, %s62, [#allocation6], 64, 64, 4
    $region25: #{_fwd.1} parent=1 // pred_fallthru
      _
    // Predicated region
    $region26: #{_fwd.1} parent=1 // pred_check
      _
    $region27: #{_fwd.1} parent=1 // pred_check_branch
      %69 = sbr.rel (0) target = $region29
    $region28: #{_fwd.1} parent=1 // pred_region
      _
    $region29: #{_fwd.1} parent=1 // pred_fallthru
      _
    // Predicated region
    $region30: #{_fwd.1} parent=1 // pred_check
      _
    $region31: #{_fwd.1} parent=1 // pred_check_branch
      %71 = sbr.rel (0) target = $region33
    $region32: #{_fwd.1} parent=1 // pred_region
      %73 = vsyncadd [#allocation9], 0
      %s74 = sshll.u32 %s7, 4
      %s75 = int_to_ptr.hbm [resolvable:$true] %s74
      %s76 = sshll.u32 [#allocation8], 4
      %s77 = int_to_ptr.vmem [resolvable:$true] %s76
      %82 = dma.hbm_to_vmem [thread:$0]  %s75, 1024, %s77, [#allocation9], 64, 64, 4
    $region33: #{_fwd.1} parent=1 // pred_fallthru
      _
    // Predicated region
    $region34: #{_fwd.1} parent=1 // pred_check
      _
    $region35: #{_fwd.1} parent=1 // pred_check_branch
      %84 = sbr.rel (0) target = $region37
    $region36: #{_fwd.1} parent=1 // pred_region
      _
    $region37: #{_fwd.1} parent=1 // pred_fallthru
      _
    // Predicated region
    $region38: #{_fwd.1} parent=1 // pred_check
      _
    $region39: #{_fwd.1} parent=1 // pred_check_branch
      %86 = sbr.rel (0) target = $region41
    $region40: #{_fwd.1} parent=1 // pred_region
      %88 = vsyncadd [#allocation9], 0
      %s89 = sshll.u32 %s9, 4
      %s90 = int_to_ptr.hbm [resolvable:$true] %s89
      %s91 = sshll.u32 [#allocation10], 4
      %s92 = int_to_ptr.vmem [resolvable:$true] %s91
      %97 = dma.hbm_to_vmem [thread:$0]  %s90, 1024, %s92, [#allocation9], 64, 64, 4
    $region41: #{_fwd.1} parent=1 // pred_fallthru
      _
    // Predicated region
    $region42: #{_fwd.1} parent=1 // pred_check
      _
    $region43: #{_fwd.1} parent=1 // pred_check_branch
      %99 = sbr.rel (0) target = $region45
    $region44: #{_fwd.1} parent=1 // pred_region
      _
    $region45: #{_fwd.1} parent=1 // pred_fallthru
      _
    // Predicated region
    $region46: #{_fwd.1} parent=1 // pred_check
      _
    $region47: #{_fwd.1} parent=1 // pred_check_branch
      %101 = sbr.rel (0) target = $region49
    $region48: #{_fwd.1} parent=1 // pred_region
      %103 = dma.done [#allocation3], 1024
    $region49: #{_fwd.1} parent=1 // pred_fallthru
      _
    // Predicated region
    $region50: #{_fwd.1} parent=1 // pred_check
      _
    $region51: #{_fwd.1} parent=1 // pred_check_branch
      %105 = sbr.rel (0) target = $region53
    $region52: #{_fwd.1} parent=1 // pred_region
      %107 = dma.done [#allocation6], 1024
    $region53: #{_fwd.1} parent=1 // pred_fallthru
      _
    // Predicated region
    $region54: #{_fwd.1} parent=1 // pred_check
      _
    $region55: #{_fwd.1} parent=1 // pred_check_branch
      %109 = sbr.rel (0) target = $region57
    $region56: #{_fwd.1} parent=1 // pred_region
      %111 = dma.done [#allocation6], 1024
    $region57: #{_fwd.1} parent=1 // pred_fallthru
      _
    // Predicated region
    $region58: #{_fwd.1} parent=1 // pred_check
      _
    $region59: #{_fwd.1} parent=1 // pred_check_branch
      %113 = sbr.rel (0) target = $region61
    $region60: #{_fwd.1} parent=1 // pred_region
      %115 = dma.done [#allocation9], 1024
    $region61: #{_fwd.1} parent=1 // pred_fallthru
      _
    // Predicated region
    $region62: #{_fwd.1} parent=1 // pred_check
      _
    $region63: #{_fwd.1} parent=1 // pred_check_branch
      %117 = sbr.rel (0) target = $region65
    $region64: #{_fwd.1} parent=1 // pred_region
      %119 = dma.done [#allocation9], 1024
    $region65: #{_fwd.1} parent=1 // pred_fallthru
      _
    %v120 = vld [vmem:[%s0] sm:$0xf]
    %v121 = vld [vmem:[#allocation2] sm:$0xf]
    %v122 = vld [vmem:[#allocation2 + $0x4] sm:$0xf]
    %v123 = vld [vmem:[#allocation2 + $0x8] sm:$0xf]
    %v124 = vld [vmem:[#allocation2 + $0xc] sm:$0xf]
    %v125 = vld [vmem:[#allocation2 + $0x10] sm:$0xf]
    %v126 = vld [vmem:[#allocation2 + $0x14] sm:$0xf]
    %v127 = vld [vmem:[#allocation2 + $0x18] sm:$0xf]
    %v128 = vld [vmem:[#allocation2 + $0x1c] sm:$0xf]
    %v129 = vld [vmem:[#allocation2 + $0x20] sm:$0xf]
    %v130 = vld [vmem:[#allocation2 + $0x24] sm:$0xf]
    %v131 = vld [vmem:[#allocation2 + $0x28] sm:$0xf]
    %v132 = vld [vmem:[#allocation2 + $0x2c] sm:$0xf]
    %v133 = vld [vmem:[#allocation2 + $0x30] sm:$0xf]
    %v134 = vld [vmem:[#allocation2 + $0x34] sm:$0xf]
    %v135 = vld [vmem:[#allocation2 + $0x38] sm:$0xf]
    %v136 = vld [vmem:[#allocation2 + $0x3c] sm:$0xf]
    %v137 = vld [vmem:[%s2] sm:$0x1]
    %v139 = vperm.slane %v137, 0
    %v157 = vunpack.c.l.b16 %v121
    %v158 = vunpack.c.l.b16 %v122
    %v159 = vunpack.c.l.b16 %v123
    %v160 = vunpack.c.l.b16 %v124
    %v161 = vunpack.c.l.b16 %v125
    %v162 = vunpack.c.l.b16 %v126
    %v163 = vunpack.c.l.b16 %v127
    %v164 = vunpack.c.l.b16 %v128
    %v165 = vunpack.c.l.b16 %v129
    %v166 = vunpack.c.l.b16 %v130
    %v167 = vunpack.c.l.b16 %v131
    %v168 = vunpack.c.l.b16 %v132
    %v169 = vunpack.c.l.b16 %v133
    %v170 = vunpack.c.l.b16 %v134
    %v171 = vunpack.c.l.b16 %v135
    %v172 = vunpack.c.l.b16 %v136
    %v173 = vpack.c.b16 %v158, %v157
    %v174 = vpack.c.b16 %v160, %v159
    %v175 = vpack.c.b16 %v162, %v161
    %v176 = vpack.c.b16 %v164, %v163
    %v177 = vpack.c.b16 %v166, %v165
    %v178 = vpack.c.b16 %v168, %v167
    %v179 = vpack.c.b16 %v170, %v169
    %v180 = vpack.c.b16 %v172, %v171
    %189 = vmatpush.bf16.msra.mxu0 %v180
    %190 = vmatpush.bf16.msra.mxu0 %v179
    %191 = vmatpush.bf16.msra.mxu0 %v178
    %192 = vmatpush.bf16.msra.mxu0 %v177
    %193 = vmatpush.bf16.msra.mxu0 %v176
    %194 = vmatpush.bf16.msra.mxu0 %v175
    %195 = vmatpush.bf16.msra.mxu0 %v174
    %196 = vmatpush.bf16.msra.mxu0 %v173
    %197 = vmatmul.bf16.gmra.mxu0 %v120
    %v198 = vpop.f32.mrf.mxu0
    %v199 = vadd.f32 %v139, %v198
    %v200 = vpop.f32.mrf.mxu0
    %201 = vdwg.mxu0
    %vm202 = vcmp.gt.f32.partialorder %v199, 0.0
    %v203 = vmul.f32 %v199, 0.2
    %v204 = vsel %vm202, %v199, %v203
    %v205 = vpack.c.bf16 %v204, %v204
    %v206 = vld [vmem:[#allocation5] sm:$0xf]
    %v207 = vld [vmem:[#allocation5 + $0x4] sm:$0xf]
    %v208 = vld [vmem:[#allocation5 + $0x8] sm:$0xf]
    %v209 = vld [vmem:[#allocation5 + $0xc] sm:$0xf]
    %v210 = vld [vmem:[#allocation5 + $0x10] sm:$0xf]
    %v211 = vld [vmem:[#allocation5 + $0x14] sm:$0xf]
    %v212 = vld [vmem:[#allocation5 + $0x18] sm:$0xf]
    %v213 = vld [vmem:[#allocation5 + $0x1c] sm:$0xf]
    %v214 = vld [vmem:[#allocation5 + $0x20] sm:$0xf]
    %v215 = vld [vmem:[#allocation5 + $0x24] sm:$0xf]
    %v216 = vld [vmem:[#allocation5 + $0x28] sm:$0xf]
    %v217 = vld [vmem:[#allocation5 + $0x2c] sm:$0xf]
    %v218 = vld [vmem:[#allocation5 + $0x30] sm:$0xf]
    %v219 = vld [vmem:[#allocation5 + $0x34] sm:$0xf]
    %v220 = vld [vmem:[#allocation5 + $0x38] sm:$0xf]
    %v221 = vld [vmem:[#allocation5 + $0x3c] sm:$0xf]
    %v222 = vld [vmem:[%s4] sm:$0x1]
    %v224 = vperm.slane %v222, 0
    %v242 = vunpack.c.l.b16 %v206
    %v243 = vunpack.c.l.b16 %v207
    %v244 = vunpack.c.l.b16 %v208
    %v245 = vunpack.c.l.b16 %v209
    %v246 = vunpack.c.l.b16 %v210
    %v247 = vunpack.c.l.b16 %v211
    %v248 = vunpack.c.l.b16 %v212
    %v249 = vunpack.c.l.b16 %v213
    %v250 = vunpack.c.l.b16 %v214
    %v251 = vunpack.c.l.b16 %v215
    %v252 = vunpack.c.l.b16 %v216
    %v253 = vunpack.c.l.b16 %v217
    %v254 = vunpack.c.l.b16 %v218
    %v255 = vunpack.c.l.b16 %v219
    %v256 = vunpack.c.l.b16 %v220
    %v257 = vunpack.c.l.b16 %v221
    %v258 = vpack.c.b16 %v243, %v242
    %v259 = vpack.c.b16 %v245, %v244
    %v260 = vpack.c.b16 %v247, %v246
    %v261 = vpack.c.b16 %v249, %v248
    %v262 = vpack.c.b16 %v251, %v250
    %v263 = vpack.c.b16 %v253, %v252
    %v264 = vpack.c.b16 %v255, %v254
    %v265 = vpack.c.b16 %v257, %v256
    %274 = vmatpush.bf16.msra.mxu0 %v265
    %275 = vmatpush.bf16.msra.mxu0 %v264
    %276 = vmatpush.bf16.msra.mxu0 %v263
    %277 = vmatpush.bf16.msra.mxu0 %v262
    %278 = vmatpush.bf16.msra.mxu0 %v261
    %279 = vmatpush.bf16.msra.mxu0 %v260
    %280 = vmatpush.bf16.msra.mxu0 %v259
    %281 = vmatpush.bf16.msra.mxu0 %v258
    %282 = vmatmul.bf16.gmra.mxu0 %v205
    %v283 = vpop.f32.mrf.mxu0
    %v284 = vadd.f32 %v224, %v283
    %v285 = vpop.f32.mrf.mxu0
    %286 = vdwg.mxu0
    %vm287 = vcmp.gt.f32.partialorder %v284, 0.0
    %v288 = vmul.f32 %v284, 0.2
    %v289 = vsel %vm287, %v284, %v288
    %v290 = vpack.c.bf16 %v289, %v289
    %v291 = vld [vmem:[#allocation7] sm:$0xf]
    %v292 = vld [vmem:[#allocation7 + $0x4] sm:$0xf]
    %v293 = vld [vmem:[#allocation7 + $0x8] sm:$0xf]
    %v294 = vld [vmem:[#allocation7 + $0xc] sm:$0xf]
    %v295 = vld [vmem:[#allocation7 + $0x10] sm:$0xf]
    %v296 = vld [vmem:[#allocation7 + $0x14] sm:$0xf]
    %v297 = vld [vmem:[#allocation7 + $0x18] sm:$0xf]
    %v298 = vld [vmem:[#allocation7 + $0x1c] sm:$0xf]
    %v299 = vld [vmem:[#allocation7 + $0x20] sm:$0xf]
    %v300 = vld [vmem:[#allocation7 + $0x24] sm:$0xf]
    %v301 = vld [vmem:[#allocation7 + $0x28] sm:$0xf]
    %v302 = vld [vmem:[#allocation7 + $0x2c] sm:$0xf]
    %v303 = vld [vmem:[#allocation7 + $0x30] sm:$0xf]
    %v304 = vld [vmem:[#allocation7 + $0x34] sm:$0xf]
    %v305 = vld [vmem:[#allocation7 + $0x38] sm:$0xf]
    %v306 = vld [vmem:[#allocation7 + $0x3c] sm:$0xf]
    %v307 = vld [vmem:[%s6] sm:$0x1]
    %v309 = vperm.slane %v307, 0
    %v327 = vunpack.c.l.b16 %v291
    %v328 = vunpack.c.l.b16 %v292
    %v329 = vunpack.c.l.b16 %v293
    %v330 = vunpack.c.l.b16 %v294
    %v331 = vunpack.c.l.b16 %v295
    %v332 = vunpack.c.l.b16 %v296
    %v333 = vunpack.c.l.b16 %v297
    %v334 = vunpack.c.l.b16 %v298
    %v335 = vunpack.c.l.b16 %v299
    %v336 = vunpack.c.l.b16 %v300
    %v337 = vunpack.c.l.b16 %v301
    %v338 = vunpack.c.l.b16 %v302
    %v339 = vunpack.c.l.b16 %v303
    %v340 = vunpack.c.l.b16 %v304
    %v341 = vunpack.c.l.b16 %v305
    %v342 = vunpack.c.l.b16 %v306
    %v343 = vpack.c.b16 %v328, %v327
    %v344 = vpack.c.b16 %v330, %v329
    %v345 = vpack.c.b16 %v332, %v331
    %v346 = vpack.c.b16 %v334, %v333
    %v347 = vpack.c.b16 %v336, %v335
    %v348 = vpack.c.b16 %v338, %v337
    %v349 = vpack.c.b16 %v340, %v339
    %v350 = vpack.c.b16 %v342, %v341
    %359 = vmatpush.bf16.msra.mxu0 %v350
    %360 = vmatpush.bf16.msra.mxu0 %v349
    %361 = vmatpush.bf16.msra.mxu0 %v348
    %362 = vmatpush.bf16.msra.mxu0 %v347
    %363 = vmatpush.bf16.msra.mxu0 %v346
    %364 = vmatpush.bf16.msra.mxu0 %v345
    %365 = vmatpush.bf16.msra.mxu0 %v344
    %366 = vmatpush.bf16.msra.mxu0 %v343
    %367 = vmatmul.bf16.gmra.mxu0 %v290
    %v368 = vpop.f32.mrf.mxu0
    %v369 = vadd.f32 %v309, %v368
    %v370 = vpop.f32.mrf.mxu0
    %371 = vdwg.mxu0
    %vm372 = vcmp.gt.f32.partialorder %v369, 0.0
    %v373 = vmul.f32 %v369, 0.2
    %v374 = vsel %vm372, %v369, %v373
    %v375 = vpack.c.bf16 %v374, %v374
    %v376 = vld [vmem:[#allocation8] sm:$0xf]
    %v377 = vld [vmem:[#allocation8 + $0x4] sm:$0xf]
    %v378 = vld [vmem:[#allocation8 + $0x8] sm:$0xf]
    %v379 = vld [vmem:[#allocation8 + $0xc] sm:$0xf]
    %v380 = vld [vmem:[#allocation8 + $0x10] sm:$0xf]
    %v381 = vld [vmem:[#allocation8 + $0x14] sm:$0xf]
    %v382 = vld [vmem:[#allocation8 + $0x18] sm:$0xf]
    %v383 = vld [vmem:[#allocation8 + $0x1c] sm:$0xf]
    %v384 = vld [vmem:[#allocation8 + $0x20] sm:$0xf]
    %v385 = vld [vmem:[#allocation8 + $0x24] sm:$0xf]
    %v386 = vld [vmem:[#allocation8 + $0x28] sm:$0xf]
    %v387 = vld [vmem:[#allocation8 + $0x2c] sm:$0xf]
    %v388 = vld [vmem:[#allocation8 + $0x30] sm:$0xf]
    %v389 = vld [vmem:[#allocation8 + $0x34] sm:$0xf]
    %v390 = vld [vmem:[#allocation8 + $0x38] sm:$0xf]
    %v391 = vld [vmem:[#allocation8 + $0x3c] sm:$0xf]
    %v392 = vld [vmem:[%s8] sm:$0x1]
    %v394 = vperm.slane %v392, 0
    %v412 = vunpack.c.l.b16 %v376
    %v413 = vunpack.c.l.b16 %v377
    %v414 = vunpack.c.l.b16 %v378
    %v415 = vunpack.c.l.b16 %v379
    %v416 = vunpack.c.l.b16 %v380
    %v417 = vunpack.c.l.b16 %v381
    %v418 = vunpack.c.l.b16 %v382
    %v419 = vunpack.c.l.b16 %v383
    %v420 = vunpack.c.l.b16 %v384
    %v421 = vunpack.c.l.b16 %v385
    %v422 = vunpack.c.l.b16 %v386
    %v423 = vunpack.c.l.b16 %v387
    %v424 = vunpack.c.l.b16 %v388
    %v425 = vunpack.c.l.b16 %v389
    %v426 = vunpack.c.l.b16 %v390
    %v427 = vunpack.c.l.b16 %v391
    %v428 = vpack.c.b16 %v413, %v412
    %v429 = vpack.c.b16 %v415, %v414
    %v430 = vpack.c.b16 %v417, %v416
    %v431 = vpack.c.b16 %v419, %v418
    %v432 = vpack.c.b16 %v421, %v420
    %v433 = vpack.c.b16 %v423, %v422
    %v434 = vpack.c.b16 %v425, %v424
    %v435 = vpack.c.b16 %v427, %v426
    %444 = vmatpush.bf16.msra.mxu0 %v435
    %445 = vmatpush.bf16.msra.mxu0 %v434
    %446 = vmatpush.bf16.msra.mxu0 %v433
    %447 = vmatpush.bf16.msra.mxu0 %v432
    %448 = vmatpush.bf16.msra.mxu0 %v431
    %449 = vmatpush.bf16.msra.mxu0 %v430
    %450 = vmatpush.bf16.msra.mxu0 %v429
    %451 = vmatpush.bf16.msra.mxu0 %v428
    %452 = vmatmul.bf16.gmra.mxu0 %v375
    %v453 = vpop.f32.mrf.mxu0
    %v454 = vadd.f32 %v394, %v453
    %v455 = vpop.f32.mrf.mxu0
    %456 = vdwg.mxu0
    %v457 = vld [vmem:[#allocation10] sm:$0xf]
    %v458 = vld [vmem:[#allocation10 + $0x4] sm:$0xf]
    %v459 = vld [vmem:[#allocation10 + $0x8] sm:$0xf]
    %v460 = vld [vmem:[#allocation10 + $0xc] sm:$0xf]
    %v461 = vld [vmem:[#allocation10 + $0x10] sm:$0xf]
    %v462 = vld [vmem:[#allocation10 + $0x14] sm:$0xf]
    %v463 = vld [vmem:[#allocation10 + $0x18] sm:$0xf]
    %v464 = vld [vmem:[#allocation10 + $0x1c] sm:$0xf]
    %v465 = vld [vmem:[#allocation10 + $0x20] sm:$0xf]
    %v466 = vld [vmem:[#allocation10 + $0x24] sm:$0xf]
    %v467 = vld [vmem:[#allocation10 + $0x28] sm:$0xf]
    %v468 = vld [vmem:[#allocation10 + $0x2c] sm:$0xf]
    %v469 = vld [vmem:[#allocation10 + $0x30] sm:$0xf]
    %v470 = vld [vmem:[#allocation10 + $0x34] sm:$0xf]
    %v471 = vld [vmem:[#allocation10 + $0x38] sm:$0xf]
    %v472 = vld [vmem:[#allocation10 + $0x3c] sm:$0xf]
    %v473 = vld [vmem:[%s10] sm:$0x1]
    %v475 = vperm.slane %v473, 0
    %v493 = vunpack.c.l.b16 %v457
    %v494 = vunpack.c.l.b16 %v458
    %v495 = vunpack.c.l.b16 %v459
    %v496 = vunpack.c.l.b16 %v460
    %v497 = vunpack.c.l.b16 %v461
    %v498 = vunpack.c.l.b16 %v462
    %v499 = vunpack.c.l.b16 %v463
    %v500 = vunpack.c.l.b16 %v464
    %v501 = vunpack.c.l.b16 %v465
    %v502 = vunpack.c.l.b16 %v466
    %v503 = vunpack.c.l.b16 %v467
    %v504 = vunpack.c.l.b16 %v468
    %v505 = vunpack.c.l.b16 %v469
    %v506 = vunpack.c.l.b16 %v470
    %v507 = vunpack.c.l.b16 %v471
    %v508 = vunpack.c.l.b16 %v472
    %v509 = vpack.c.b16 %v494, %v493
    %v510 = vpack.c.b16 %v496, %v495
    %v511 = vpack.c.b16 %v498, %v497
    %v512 = vpack.c.b16 %v500, %v499
    %v513 = vpack.c.b16 %v502, %v501
    %v514 = vpack.c.b16 %v504, %v503
    %v515 = vpack.c.b16 %v506, %v505
    %v516 = vpack.c.b16 %v508, %v507
    %525 = vmatpush.bf16.msra.mxu0 %v516
    %526 = vmatpush.bf16.msra.mxu0 %v515
    %527 = vmatpush.bf16.msra.mxu0 %v514
    %528 = vmatpush.bf16.msra.mxu0 %v513
    %529 = vmatpush.bf16.msra.mxu0 %v512
    %530 = vmatpush.bf16.msra.mxu0 %v511
    %531 = vmatpush.bf16.msra.mxu0 %v510
    %532 = vmatpush.bf16.msra.mxu0 %v509
    %533 = vmatmul.bf16.gmra.mxu0 %v375
    %v534 = vpop.f32.mrf.mxu0
    %v535 = vadd.f32 %v475, %v534
    %v536 = vpop.f32.mrf.mxu0
    %537 = vdwg.mxu0
    %538 = vst [vmem:[#allocation11] sm:$0xff] %v454
    %539 = vst [vmem:[#allocation12] sm:$0xff] %v535
    // Predicated region
    $region66: #{_fwd.1} parent=1 // pred_check
      _
    $region67: #{_fwd.1} parent=1 // pred_check_branch
      %541 = sbr.rel (0) target = $region69
    $region68: #{_fwd.1} parent=1 // pred_region
      %543 = vsyncadd [#allocation4], 0
      %s545 = sshll.u32 [#allocation11], 4
      %s546 = int_to_ptr.vmem [resolvable:$true] %s545
      %s547 = sshll.u32 %s11, 4
      %s548 = int_to_ptr.hbm [resolvable:$true] %s547
      %550 = dma.vmem_to_hbm [thread:$0]  %s546, 128, %s548, [#allocation4]
    $region69: #{_fwd.1} parent=1 // pred_fallthru
      _
    // Predicated region
    $region70: #{_fwd.1} parent=1 // pred_check
      _
    $region71: #{_fwd.1} parent=1 // pred_check_branch
      %552 = sbr.rel (0) target = $region73
    $region72: #{_fwd.1} parent=1 // pred_region
      %554 = vsyncadd [#allocation13], 0
      %s556 = sshll.u32 [#allocation12], 4
      %s557 = int_to_ptr.vmem [resolvable:$true] %s556
      %s558 = sshll.u32 %s12, 4
      %s559 = int_to_ptr.hbm [resolvable:$true] %s558
      %561 = dma.vmem_to_hbm [thread:$0]  %s557, 128, %s559, [#allocation13]
    $region73: #{_fwd.1} parent=1 // pred_fallthru
      _
    // Predicated region
    $region74: #{_fwd.1} parent=1 // pred_check
      _
    $region75: #{_fwd.1} parent=1 // pred_check_branch
      %563 = sbr.rel (0) target = $region77
    $region76: #{_fwd.1} parent=1 // pred_region
      %565 = dma.done [#allocation4], 128
    $region77: #{_fwd.1} parent=1 // pred_fallthru
      _
    // Predicated region
    $region78: #{_fwd.1} parent=1 // pred_check
      _
    $region79: #{_fwd.1} parent=1 // pred_check_branch
      %567 = sbr.rel (0) target = $region81
    $region80: #{_fwd.1} parent=1 // pred_region
      %569 = dma.done [#allocation13], 128
    $region81: #{_fwd.1} parent=1 // pred_fallthru
      _
    %570 = vsyncpa [#allocation3], 1
    %571 = vsyncpa [#allocation6], 1
    %572 = vsyncpa [#allocation9], 1
    %573 = vsyncpa [#allocation4], 1
    %574 = vsyncpa [#allocation13], 1

</llo_original>
